<compile_context>
chip_gen: v6e
topology: v6e:2x2x1
jax: 0.10.0
libtpu: 0.0.40
codegen_flags: <defaults>
</compile_context>

<pallas_src>
import functools

import jax
import jax.numpy as jnp
from jax import lax
from jax.experimental import pallas as pl
from jax.experimental.pallas import tpu as pltpu


def _focal_loss_kernel(logits_ref, targets_ref, posw_ref, out_ref, *,
                       gamma, gamma_is_int, tm, rows_total, need_mask):
    x = logits_ref[...].astype(jnp.float32)        # (tm, N)
    t = targets_ref[...].astype(jnp.float32)       # (tm, N)
    pw = posw_ref[...].astype(jnp.float32)         # (1,  N) broadcast over rows

    # Numerically-stable BCE-with-logits, identical to torch's formulation
    # (pos_weight via log_weight = 1 + (pw - 1) * t).
    log_weight = 1.0 + (pw - 1.0) * t
    softplus_neg_abs = jnp.log1p(jnp.exp(-jnp.abs(x)))
    bce = (1.0 - t) * x + log_weight * (softplus_neg_abs + jnp.maximum(-x, 0.0))

    pt = jnp.exp(-bce)
    # Clamp guards against (1 - pt) being a tiny negative when bce ~ 0.
    one_minus_pt = jnp.maximum(1.0 - pt, 0.0)
    if gamma_is_int:
        # gamma=2 lowers to a single multiply (VPU), no extra EUP work.
        modulator = lax.integer_pow(one_minus_pt, int(gamma))
    else:
        modulator = jnp.power(one_minus_pt, jnp.float32(gamma))
    focal = modulator * bce

    if need_mask:
        # Zero out padded rows (batch was padded up to a multiple of tm).
        i = pl.program_id(0)
        row = i * tm + lax.broadcasted_iota(jnp.int32, (tm, 1), 0)
        focal = jnp.where(row < rows_total, focal, 0.0)

    # Lane-dense per-block partial column sums; final reduce happens outside.
    out_ref[...] = jnp.sum(focal, axis=0, keepdims=True)


def _choose_tm(M, N, *, max_tile_bytes=2 << 20, max_rows=1024):
    """Largest row tile (multiple of 8) with tm*N*4B <= max_tile_bytes.

    2 inputs x 2 pipeline buffers x 2 MiB = 8 MiB, comfortably under the
    default 32 MiB scoped VMEM on v5e/v6e/v7x.
    """
    tm = (max_tile_bytes // (N * 4)) // 8 * 8
    tm = max(8, min(max_rows, tm))
    tm = min(tm, ((M + 7) // 8) * 8)      # don't exceed (padded) batch
    return tm


def focal_loss(logits, targets, pos_weight=None, *, gamma=2.0,
               reduction="mean", tm=None):
    """Pallas TPU focal loss. logits/targets: [batch, num_labels] arrays."""
    M, N = logits.shape
    assert targets.shape == (M, N)
    # TODO(synk): for very wide label spaces (N in the tens of thousands) also
    # tile N in multiples of 128 with a 2-D grid to bound VMEM.

    if tm is None:
        tm = _choose_tm(M, N)
    num_blocks = pl.cdiv(M, tm)
    m_padded = num_blocks * tm
    need_mask = m_padded != M
    if need_mask:
        pad = ((0, m_padded - M), (0, 0))
        logits = jnp.pad(logits, pad)
        targets = jnp.pad(targets, pad)

    if pos_weight is None:
        pw = jnp.ones((1, N), dtype=jnp.float32)
    else:
        pw = jnp.asarray(pos_weight, dtype=jnp.float32).reshape(1, N)

    gamma_is_int = float(gamma).is_integer()
    kernel = functools.partial(
        _focal_loss_kernel,
        gamma=float(gamma), gamma_is_int=gamma_is_int,
        tm=tm, rows_total=M, need_mask=need_mask)

    partials = pl.pallas_call(
        kernel,
        out_shape=jax.ShapeDtypeStruct((num_blocks, N), jnp.float32),
        grid_spec=pltpu.PrefetchScalarGridSpec(
            num_scalar_prefetch=0,
            grid=(num_blocks,),
            in_specs=[
                pl.BlockSpec((tm, N), lambda i: (i, 0)),
                pl.BlockSpec((tm, N), lambda i: (i, 0)),
                pl.BlockSpec((1, N), lambda i: (0, 0)),   # grid-invariant
            ],
            out_specs=pl.BlockSpec((1, N), lambda i: (i, 0)),
        ),
        compiler_params=pltpu.CompilerParams(
            # Each grid step writes its own output block -> independent, so the
            # axis can be sharded across TensorCores (2x on v7x megacore).
            dimension_semantics=("parallel",)),
    )(logits, targets, pw)

    total = jnp.sum(partials)
    if reduction == "mean":
        return total / jnp.float32(M * N)
    return total  # 'sum'


def _focal_loss_ref(logits, targets, pos_weight=None, gamma=2.0,
                    reduction="mean"):
    x = logits.astype(jnp.float32)
    t = targets.astype(jnp.float32)
    pw = jnp.ones_like(x) if pos_weight is None else jnp.broadcast_to(
        jnp.asarray(pos_weight, jnp.float32), x.shape)
    log_weight = 1.0 + (pw - 1.0) * t
    bce = (1.0 - t) * x + log_weight * (jnp.log1p(jnp.exp(-jnp.abs(x)))
                                        + jnp.maximum(-x, 0.0))
    pt = jnp.exp(-bce)
    focal = (1.0 - pt) ** gamma * bce
    return jnp.mean(focal) if reduction == "mean" else jnp.sum(focal)


if __name__ == "__main__":
    key = jax.random.PRNGKey(0)
    k1, k2, k3 = jax.random.split(key, 3)

    batch, num_labels = 16, 128          # small, (8,128)-aligned shapes
    logits = jax.random.normal(k1, (batch, num_labels), dtype=jnp.float32) * 2.0
    targets = jax.random.bernoulli(k2, 0.3, (batch, num_labels)).astype(jnp.float32)
    # deterministic synthetic pos_weight (module default is None; exercised here)
    pos_weight = 0.5 + jax.random.uniform(k3, (num_labels,), dtype=jnp.float32)

    out = focal_loss(logits, targets, pos_weight, gamma=2.0, reduction="mean")
    out = jax.block_until_ready(out)
    ref = _focal_loss_ref(logits, targets, pos_weight, gamma=2.0)
    assert jnp.allclose(out, ref, rtol=1e-5, atol=1e-6), (out, ref)

    # no pos_weight + batch not a multiple of the tile (exercises mask path)
    out2 = focal_loss(logits[:13], targets[:13], None, gamma=2.0,
                      reduction="mean")
    out2 = jax.block_until_ready(out2)
    ref2 = _focal_loss_ref(logits[:13], targets[:13], None, gamma=2.0)
    assert jnp.allclose(out2, ref2, rtol=1e-5, atol=1e-6), (out2, ref2)

    # 'sum' reduction
    out3 = jax.block_until_ready(
        focal_loss(logits, targets, pos_weight, gamma=2.0, reduction="sum"))
    ref3 = _focal_loss_ref(logits, targets, pos_weight, gamma=2.0,
                           reduction="sum")
    assert jnp.allclose(out3, ref3, rtol=1e-5, atol=1e-5), (out3, ref3)

    print("KERNEL_OK")
</pallas_src>

<mosaic_0001>
module attributes {stable_mosaic.version = 11 : i64} {
  func.func @_focal_loss_kernel(%arg0: i32, %arg1: memref<16x128xf32, #tpu.memory_space<vmem>>, %arg2: memref<16x128xf32, #tpu.memory_space<vmem>>, %arg3: memref<1x128xf32, #tpu.memory_space<vmem>>, %arg4: memref<1x128xf32, #tpu.memory_space<vmem>>) attributes {dimension_semantics = [#tpu.dimension_semantics<parallel>], iteration_bounds = array<i64: 1>, scalar_prefetch = 0 : i64, scratch_operands = 0 : i64, tpu.core_type = #tpu.core_type<tc>, window_params = [{transform_indices = @transform_0, window_bounds = array<i64: 16, 128>}, {transform_indices = @transform_1, window_bounds = array<i64: 16, 128>}, {pipeline_mode = #tpu.pipeline_mode<synchronous>, transform_indices = @transform_2, window_bounds = array<i64: 1, 128>}, {transform_indices = @transform_3, window_bounds = array<i64: 1, 128>}]} {
    %c0 = arith.constant 0 : index
    %c0_0 = arith.constant 0 : index
    %0 = vector.load %arg1[%c0, %c0_0] : memref<16x128xf32, #tpu.memory_space<vmem>>, vector<16x128xf32>
    %c0_1 = arith.constant 0 : index
    %c0_2 = arith.constant 0 : index
    %1 = vector.load %arg2[%c0_1, %c0_2] : memref<16x128xf32, #tpu.memory_space<vmem>>, vector<16x128xf32>
    %c0_3 = arith.constant 0 : index
    %c0_4 = arith.constant 0 : index
    %2 = vector.load %arg3[%c0_3, %c0_4] : memref<1x128xf32, #tpu.memory_space<vmem>>, vector<1x128xf32>
    %cst = arith.constant 1.000000e+00 : f32
    %3 = vector.broadcast %cst : f32 to vector<1x128xf32>
    %4 = arith.subf %2, %3 : vector<1x128xf32>
    %5 = vector.broadcast %4 : vector<1x128xf32> to vector<16x128xf32>
    %6 = arith.mulf %5, %1 : vector<16x128xf32>
    %cst_5 = arith.constant 1.000000e+00 : f32
    %7 = vector.broadcast %cst_5 : f32 to vector<16x128xf32>
    %8 = arith.addf %7, %6 : vector<16x128xf32>
    %9 = math.absf %0 : vector<16x128xf32>
    %cst_6 = arith.constant 0.000000e+00 : f32
    %10 = vector.broadcast %cst_6 : f32 to vector<16x128xf32>
    %11 = arith.subf %10, %9 : vector<16x128xf32>
    %12 = math.exp %11 : vector<16x128xf32>
    %13 = math.log1p %12 : vector<16x128xf32>
    %cst_7 = arith.constant 1.000000e+00 : f32
    %14 = vector.broadcast %cst_7 : f32 to vector<16x128xf32>
    %15 = arith.subf %14, %1 : vector<16x128xf32>
    %16 = arith.mulf %15, %0 : vector<16x128xf32>
    %cst_8 = arith.constant 0.000000e+00 : f32
    %17 = vector.broadcast %cst_8 : f32 to vector<16x128xf32>
    %18 = arith.subf %17, %0 : vector<16x128xf32>
    %cst_9 = arith.constant 0.000000e+00 : f32
    %19 = vector.broadcast %cst_9 : f32 to vector<16x128xf32>
    %20 = arith.maximumf %18, %19 : vector<16x128xf32>
    %21 = arith.addf %13, %20 : vector<16x128xf32>
    %22 = arith.mulf %8, %21 : vector<16x128xf32>
    %23 = arith.addf %16, %22 : vector<16x128xf32>
    %cst_10 = arith.constant 0.000000e+00 : f32
    %24 = vector.broadcast %cst_10 : f32 to vector<16x128xf32>
    %25 = arith.subf %24, %23 : vector<16x128xf32>
    %26 = math.exp %25 : vector<16x128xf32>
    %cst_11 = arith.constant 1.000000e+00 : f32
    %27 = vector.broadcast %cst_11 : f32 to vector<16x128xf32>
    %28 = arith.subf %27, %26 : vector<16x128xf32>
    %cst_12 = arith.constant 0.000000e+00 : f32
    %29 = vector.broadcast %cst_12 : f32 to vector<16x128xf32>
    %30 = arith.maximumf %28, %29 : vector<16x128xf32>
    %31 = arith.mulf %30, %30 : vector<16x128xf32>
    %32 = arith.mulf %31, %23 : vector<16x128xf32>
    %cst_13 = arith.constant dense<0.000000e+00> : vector<128xf32>
    %33 = vector.multi_reduction <add>, %32, %cst_13 [0] : vector<16x128xf32> to vector<128xf32>
    %34 = vector.shape_cast %33 : vector<128xf32> to vector<1x128xf32>
    %c0_14 = arith.constant 0 : index
    %c0_15 = arith.constant 0 : index
    %35 = vector.load %arg4[%c0_14, %c0_15] : memref<1x128xf32, #tpu.memory_space<vmem>>, vector<1x128xf32>
    tpu.vector_store %arg4[%c0_14, %c0_15], %34 {strides = array<i32>} : memref<1x128xf32, #tpu.memory_space<vmem>>, vector<1x128xf32>,
    return
  }
  func.func @transform_0(%arg0: i32) -> (i32, i32) {
    %c0_i32 = arith.constant 0 : i32
    %c0_i32_0 = arith.constant 0 : i32
    return %arg0, %c0_i32 : i32, i32
  }
  func.func @transform_1(%arg0: i32) -> (i32, i32) {
    %c0_i32 = arith.constant 0 : i32
    %c0_i32_0 = arith.constant 0 : i32
    return %arg0, %c0_i32 : i32, i32
  }
  func.func @transform_2(%arg0: i32) -> (i32, i32) {
    %c0_i32 = arith.constant 0 : i32
    %c0_i32_0 = arith.constant 0 : i32
    %c0_i32_1 = arith.constant 0 : i32
    return %c0_i32, %c0_i32_0 : i32, i32
  }
  func.func @transform_3(%arg0: i32) -> (i32, i32) {
    %c0_i32 = arith.constant 0 : i32
    %c0_i32_0 = arith.constant 0 : i32
    return %arg0, %c0_i32 : i32, i32
  }
}

</mosaic_0001>

<llo_original>
// kernel: tpu_custom_call.1
$region0: #{tpu_custom_call.1}
  #allocation0 [shape = 'u32[]', space=smem, size = 0x4, offset = 0x4, fixed_abs, tag = 'smem constant byte address 0x4 - core index']
  #allocation1 [shape = 'u32[144,128]{1,0:T(1,128)}', space=vmem, size = 0x12000, scoped, tag = 'internal scratch']
  %s0 = inlined_call_operand.hbm [shape: f32[16,128], index: 0, kind: input, shape index: {}]
  %s1 = inlined_call_operand.hbm [shape: f32[16,128], index: 1, kind: input, shape index: {}]
  %s2 = inlined_call_operand.vmem [shape: f32[1,128], index: 2, kind: input, shape index: {}]
  %s3 = inlined_call_operand.hbm [shape: f32[1,128], index: 3, kind: output, shape index: {}]
  %s4 = sld [smem:[#allocation0]]
  $region30: #{tpu_custom_call.1} parent=0
    _
  %s6 = ssub.s32 1, %s4
  %s7 = scalar_select 0, %s6, %s4
  $region1: #{tpu_custom_call.1} parent=0
    #allocation2 [shape = 'u8[8192]{0}', space=vmem, size = 0x2000, scoped, tag = 'input window, operand 0, single buffered']
    #allocation3 [shape = 's32[1]{0}', space=sflag, size = 0x4, scoped, tag = 'scoped memory for tpu_custom_call.1']
    #allocation4 [shape = 's32[1]{0}', space=sflag, size = 0x4, scoped, tag = 'scoped memory for tpu_custom_call.1']
    #allocation5 [shape = 'u8[8192]{0}', space=vmem, size = 0x2000, scoped, tag = 'input window, operand 1, single buffered']
    #allocation6 [shape = 's32[1]{0}', space=sflag, size = 0x4, scoped, tag = 'scoped memory for tpu_custom_call.1']
    #allocation7 [shape = 'u8[512]{0}', space=vmem, size = 0x400, scoped, tag = 'output window, operand 0, single buffered']
    %8 = vsyncpa [#allocation3], 0
    %9 = vsyncpa [#allocation6], 0
    %10 = vsyncpa [#allocation4], 0
    // Predicated region
    $region2: #{tpu_custom_call.1} parent=1 // pred_check
      _
    $region3: #{tpu_custom_call.1} parent=1 // pred_check_branch
      %12 = sbr.rel (0) target = $region5
    $region4: #{tpu_custom_call.1} parent=1 // pred_region
      %s14 = ssub.s32 256, 256
      %15 = vsyncadd [#allocation3], %s14
      %s16 = sshll.u32 [#allocation2], 4
      %s17 = int_to_ptr.vmem [resolvable:$true] %s16
      %22 = dma.hbm_to_vmem [thread:$0]  %s0, 256, %s17, [#allocation3], 128, 128, 8
    $region5: #{tpu_custom_call.1} parent=1 // pred_fallthru
      _
    // Predicated region
    $region6: #{tpu_custom_call.1} parent=1 // pred_check
      _
    $region7: #{tpu_custom_call.1} parent=1 // pred_check_branch
      %24 = sbr.rel (0) target = $region9
    $region8: #{tpu_custom_call.1} parent=1 // pred_region
      %s26 = ssub.s32 256, 256
      %27 = vsyncadd [#allocation6], %s26
      %s28 = sshll.u32 [#allocation5], 4
      %s29 = int_to_ptr.vmem [resolvable:$true] %s28
      %34 = dma.hbm_to_vmem [thread:$0]  %s1, 256, %s29, [#allocation6], 128, 128, 8
    $region9: #{tpu_custom_call.1} parent=1 // pred_fallthru
      _
    // Predicated region
    $region10: #{tpu_custom_call.1} parent=1 // pred_check
      _
    $region11: #{tpu_custom_call.1} parent=1 // pred_check_branch
      %36 = sbr.rel (0) target = $region13
    $region12: #{tpu_custom_call.1} parent=1 // pred_region
      _
    $region13: #{tpu_custom_call.1} parent=1 // pred_fallthru
      _
    // Predicated region
    $region14: #{tpu_custom_call.1} parent=1 // pred_check
      _
    $region15: #{tpu_custom_call.1} parent=1 // pred_check_branch
      %38 = sbr.rel (0) target = $region17
    $region16: #{tpu_custom_call.1} parent=1 // pred_region
      %39 = dma.done [#allocation3], 256
    $region17: #{tpu_custom_call.1} parent=1 // pred_fallthru
      _
    // Predicated region
    $region18: #{tpu_custom_call.1} parent=1 // pred_check
      _
    $region19: #{tpu_custom_call.1} parent=1 // pred_check_branch
      %41 = sbr.rel (0) target = $region21
    $region20: #{tpu_custom_call.1} parent=1 // pred_region
      %42 = dma.done [#allocation6], 256
    $region21: #{tpu_custom_call.1} parent=1 // pred_fallthru
      _
    %v43 = vld [vmem:[#allocation2] sm:$0xff]
    %v44 = vld [vmem:[#allocation2 + $0x8] sm:$0xff]
    %v45 = vld [vmem:[#allocation5] sm:$0xff]
    %v46 = vld [vmem:[#allocation5 + $0x8] sm:$0xff]
    %v47 = vld [vmem:[%s2] sm:$0x1]
    %v48 = vsub.f32 %v47, 1.0
    %v50 = vlaneseq
    %v51 = vshrl.u32 %v50, 7
    %v52 = vsub.s32 0, %v51
    %v53 = vrot.slane %v48, %v52
    %v55 = vmul.f32 %v53, %v45
    %v56 = vmul.f32 %v53, %v46
    %v57 = vadd.f32 %v55, 1.0
    %v58 = vadd.f32 %v56, 1.0
    %v59 = vand.u32 2147483647, %v43
    %v60 = vand.u32 2147483647, %v44
    %v61 = vsub.f32 0.0, %v59
    %v62 = vsub.f32 0.0, %v60
    %v63 = vmul.f32 %v61, 1.442695
    %v64 = vpow.pop %v63
    %v65 = vmul.f32 %v62, 1.442695
    %v66 = vpow.pop %v65
    %v67 = vadd.f32 %v64, 1.0
    %v68 = vlog2.pop %v67
    %v69 = vmul.f32 %v68, 0.6931472
    %v70 = vmul.f32 -0.5, %v64
    %v71 = vadd.f32 %v70, 1.0
    %v72 = vmul.f32 %v71, %v64
    %v73 = vand.u32 2147483647, %v64
    %vm74 = vcmp.lt.f32.partialorder %v73, 0.0004427343
    %v75 = vsel %vm74, %v72, %v69
    %v76 = vadd.f32 %v66, 1.0
    %v77 = vlog2.pop %v76
    %v78 = vmul.f32 %v77, 0.6931472
    %v79 = vmul.f32 -0.5, %v66
    %v80 = vadd.f32 %v79, 1.0
    %v81 = vmul.f32 %v80, %v66
    %v82 = vand.u32 2147483647, %v66
    %vm83 = vcmp.lt.f32.partialorder %v82, 0.0004427343
    %v84 = vsel %vm83, %v81, %v78
    %v85 = vsub.f32 1.0, %v45
    %v86 = vsub.f32 1.0, %v46
    %v87 = vmul.f32 %v85, %v43
    %v88 = vmul.f32 %v86, %v44
    %v89 = vsub.f32 0.0, %v43
    %v90 = vsub.f32 0.0, %v44
    %v91 = vmax.f32 %v89, 0.0
    %v92 = vmax.f32 %v90, 0.0
    %v93 = vadd.f32 %v75, %v91
    %v94 = vadd.f32 %v84, %v92
    %v95 = vmul.f32 %v57, %v93
    %v96 = vmul.f32 %v58, %v94
    %v97 = vadd.f32 %v87, %v95
    %v98 = vadd.f32 %v88, %v96
    %v99 = vsub.f32 0.0, %v97
    %v100 = vsub.f32 0.0, %v98
    %v101 = vmul.f32 %v99, 1.442695
    %v102 = vpow.pop %v101
    %v103 = vmul.f32 %v100, 1.442695
    %v104 = vpow.pop %v103
    %v105 = vsub.f32 1.0, %v102
    %v106 = vsub.f32 1.0, %v104
    %v107 = vmax.f32 %v105, 0.0
    %v108 = vmax.f32 %v106, 0.0
    %v109 = vmul.f32 %v107, %v107
    %v110 = vmul.f32 %v108, %v108
    %v111 = vmul.f32 %v109, %v97
    %v112 = vmul.f32 %v110, %v98
    %v113 = vadd.f32 %v111, %v112
    %v114 = vrot.slane %v113, 4
    %v115 = vadd.f32 %v113, %v114
    %v116 = vrot.slane %v115, 2
    %v117 = vadd.f32 %v115, %v116
    %v118 = vrot.slane %v117, 1
    %v119 = vadd.f32 %v117, %v118
    %120 = vst [vmem:[#allocation7] sm:$0x1] %v119
    // Predicated region
    $region22: #{tpu_custom_call.1} parent=1 // pred_check
      _
    $region23: #{tpu_custom_call.1} parent=1 // pred_check_branch
      %122 = sbr.rel (0) target = $region25
    $region24: #{tpu_custom_call.1} parent=1 // pred_region
      %s124 = ssub.s32 16, 16
      %125 = vsyncadd [#allocation4], %s124
      %s127 = sshll.u32 [#allocation7], 4
      %s128 = int_to_ptr.vmem [resolvable:$true] %s127
      %130 = dma.vmem_to_hbm [thread:$0]  %s128, 16, %s3, [#allocation4]
    $region25: #{tpu_custom_call.1} parent=1 // pred_fallthru
      _
    // Predicated region
    $region26: #{tpu_custom_call.1} parent=1 // pred_check
      _
    $region27: #{tpu_custom_call.1} parent=1 // pred_check_branch
      %132 = sbr.rel (0) target = $region29
    $region28: #{tpu_custom_call.1} parent=1 // pred_region
      %133 = dma.done [#allocation4], 16
    $region29: #{tpu_custom_call.1} parent=1 // pred_fallthru
      _
    %134 = vsyncpa [#allocation3], 1
    %135 = vsyncpa [#allocation6], 1
    %136 = vsyncpa [#allocation4], 1

</llo_original>
